<compile_context>
chip_gen: v7x
topology: tpu7x:2x2x1
jax: 0.10.0
libtpu: 0.0.40
codegen_flags: <defaults>
</compile_context>

<pallas_src>
import jax
import jax.numpy as jnp
from jax.experimental import pallas as pl
from jax.experimental.pallas import tpu as pltpu


def _round_up(x, m):
    return ((x + m - 1) // m) * m


# ----------------------------------------------------------------------------
# Forward: fused 2-layer MLP (the averaged model)
# ----------------------------------------------------------------------------
def _mlp_kernel(x_ref, w1_ref, b1_ref, w2_ref, b2_ref, o_ref):
    # x_ref: (TB, D) f32, w1_ref: (D, Hp) bf16, b1_ref: (1, Hp) f32
    # w2_ref: (Hp, Op) bf16, b2_ref: (1, Op) f32, o_ref: (TB, Op) f32
    x = x_ref[...].astype(jnp.bfloat16)                                # cast in-kernel
    h = jnp.dot(x, w1_ref[...], preferred_element_type=jnp.float32)   # MXU, f32 acc
    h = jnp.maximum(h + b1_ref[...], 0.0)                             # bias + ReLU, f32 VPU
    y = jnp.dot(h.astype(jnp.bfloat16), w2_ref[...],
                preferred_element_type=jnp.float32)                   # MXU, f32 acc
    # TODO(synk): if this layer ever becomes HBM-store-bound, write bf16 here
    # (only O of the Op padded lanes are real data).
    o_ref[...] = (y + b2_ref[...]).astype(o_ref.dtype)


def prepare_forward_weights(params):
    """Pad (lane-dense) + bf16-cast the averaged weights ONCE; reuse across calls."""
    w1, b1, w2, b2 = params
    D, H = w1.shape
    O = w2.shape[1]
    LANE = 128
    Hp = _round_up(H, LANE)
    Op = _round_up(O, LANE)
    w1_p = jnp.zeros((D, Hp), jnp.bfloat16).at[:, :H].set(w1.astype(jnp.bfloat16))
    b1_p = jnp.zeros((1, Hp), jnp.float32).at[:, :H].set(
        jnp.asarray(b1, jnp.float32).reshape(1, -1))
    w2_p = jnp.zeros((Hp, Op), jnp.bfloat16).at[:H, :O].set(w2.astype(jnp.bfloat16))
    b2_p = jnp.zeros((1, Op), jnp.float32).at[:, :O].set(
        jnp.asarray(b2, jnp.float32).reshape(1, -1))
    return (w1_p, b1_p, w2_p, b2_p, (D, H, O))


def _choose_batch_tile(B):
    """Batch tile: as large as possible (<=256, multiple of 16) while keeping
    at least 2 grid steps so v7x's two TensorCores both get work."""
    SUB = 16      # bf16 sublane packing quantum
    TB_MAX = 256  # matches the 256-row MXU on v6e/v7x; >=128 fills v5e's MXU
    tb = min(TB_MAX, _round_up(max(pl.cdiv(B, 2), 1), SUB))
    grid_b = pl.cdiv(B, tb)
    return tb, grid_b


def averaged_mlp_forward(x, fwd_weights):
    """AveragedModel.forward(x): run the averaged MLP (f32 in / f32 out)."""
    w1_p, b1_p, w2_p, b2_p, (D, H, O) = fwd_weights
    B = x.shape[0]
    assert x.shape[1] == D
    Hp = w1_p.shape[1]
    Op = w2_p.shape[1]

    tb, grid_b = _choose_batch_tile(B)

    out = pl.pallas_call(
        _mlp_kernel,
        out_shape=jax.ShapeDtypeStruct((B, Op), jnp.float32),
        grid=(grid_b,),
        in_specs=[
            pl.BlockSpec((tb, D), lambda i: (i, 0)),    # x: batch-blocked, full D
            pl.BlockSpec((D, Hp), lambda i: (0, 0)),    # W1: whole, VMEM-resident
            pl.BlockSpec((1, Hp), lambda i: (0, 0)),    # b1
            pl.BlockSpec((Hp, Op), lambda i: (0, 0)),   # W2
            pl.BlockSpec((1, Op), lambda i: (0, 0)),    # b2
        ],
        out_specs=pl.BlockSpec((tb, Op), lambda i: (i, 0)),  # lane-dense stores
        compiler_params=pltpu.CompilerParams(
            dimension_semantics=("parallel",)),              # 2 TCs split batch on v7x
    )(x, w1_p, b1_p, w2_p, b2_p)

    return out[:, :O]


# ----------------------------------------------------------------------------
# SWA state: parameters packed persistently into a (rows, 128) f32 slab
# ----------------------------------------------------------------------------
_SWA_LANE = 128
_SWA_MAX_BLOCK_ROWS = 512   # 512*128*4B = 256 KiB per slab block (3 slabs + dbl-buf ~1.5 MiB)


def _swa_block_rows(rows):
    return min(rows, _SWA_MAX_BLOCK_ROWS)


def _slab_rows_for(total):
    rows = _round_up(pl.cdiv(total, _SWA_LANE), 8)
    return _round_up(rows, _swa_block_rows(rows))


def pack_params(params):
    """Pack a parameter tuple into a lane-dense f32 slab (done once per tensor set)."""
    shapes = tuple(p.shape for p in params)
    sizes = tuple(int(p.size) for p in params)
    total = sum(sizes)
    rows = _slab_rows_for(total)
    flat = jnp.concatenate([jnp.ravel(p).astype(jnp.float32) for p in params])
    flat = jnp.pad(flat, (0, rows * _SWA_LANE - total))
    return flat.reshape(rows, _SWA_LANE), (shapes, sizes, total)


def unpack_params(slab, meta):
    shapes, sizes, total = meta
    flat = slab.reshape(-1)[:total]
    out, off = [], 0
    for shape, size in zip(shapes, sizes):
        out.append(flat[off:off + size].reshape(shape))
        off += size
    return tuple(out)


# ----------------------------------------------------------------------------
# SWA update_parameters: grid-tiled fused elementwise kernel, in-place slab
# ----------------------------------------------------------------------------
def _swa_update_kernel(swa_ref, model_ref, inv_ref, out_ref):
    # p_new = p + (m - p) * inv,  inv = 1/(n_pre + 2)  (module's post-increment form)
    p = swa_ref[...]
    out_ref[...] = p + (model_ref[...] - p) * inv_ref[0]


def _swa_pallas(swa_slab, model_slab, n_arr):
    rows = swa_slab.shape[0]
    tr = _swa_block_rows(rows)
    inv = 1.0 / (n_arr.astype(jnp.float32) + 2.0)   # (1,) scalar, SMEM
    return pl.pallas_call(
        _swa_update_kernel,
        out_shape=jax.ShapeDtypeStruct(swa_slab.shape, jnp.float32),
        grid=(rows // tr,),
        in_specs=[
            pl.BlockSpec((tr, _SWA_LANE), lambda i: (i, 0)),          # p_swa (aliased)
            pl.BlockSpec((tr, _SWA_LANE), lambda i: (i, 0)),          # p_model
            pl.BlockSpec(memory_space=pltpu.MemorySpace.SMEM),        # 1/(n+2) scalar
        ],
        out_specs=pl.BlockSpec((tr, _SWA_LANE), lambda i: (i, 0)),
        input_output_aliases={0: 0},                                  # in-place slab
        compiler_params=pltpu.CompilerParams(
            dimension_semantics=("parallel",)),
    )(swa_slab, model_slab, inv)


# Donate the averaged slab so the in-place alias is real (no defensive copy).
_swa_update_jit = jax.jit(_swa_pallas, donate_argnums=(0,))


def update_parameters(avg_slab, model_params, n_averaged):
    """Module semantics: n += 1; p = (p*n + m)/(n+1).  Returns (new_slab, new_n)."""
    model_slab, _ = pack_params(model_params)
    n_arr = jnp.array([n_averaged], jnp.int32)
    new_slab = _swa_update_jit(avg_slab, model_slab, n_arr)
    return new_slab, n_averaged + 1


# ----------------------------------------------------------------------------
# Param init / demo
# ----------------------------------------------------------------------------
def init_mlp_params(key, d_in, d_hidden, d_out):
    k1, k2, k3, k4 = jax.random.split(key, 4)
    w1 = jax.random.normal(k1, (d_in, d_hidden), jnp.float32) * 0.05
    b1 = jax.random.normal(k2, (1, d_hidden), jnp.float32) * 0.05
    w2 = jax.random.normal(k3, (d_hidden, d_out), jnp.float32) * 0.05
    b2 = jax.random.normal(k4, (1, d_out), jnp.float32) * 0.05
    return (w1, b1, w2, b2)


if __name__ == "__main__":
    # Batch 256 -> tile 128, even 2-step grid (both v7x TensorCores busy).
    B, D, H, O = 256, 64, 64, 16

    key = jax.random.PRNGKey(0)
    k_model, k_u1, k_u2, k_x = jax.random.split(key, 4)

    # AveragedModel.__init__: averaged copy = deepcopy(model); n_averaged = 0.
    model_params = init_mlp_params(k_model, D, H, O)
    avg_slab, meta = pack_params(model_params)     # persistent packed SWA state
    n_averaged = 0

    # Pure-JAX reference of the running average (module semantics).
    ref_avg = tuple(model_params)
    ref_n = 0

    # Two SWA updates with different "model" snapshots.
    for k_upd in (k_u1, k_u2):
        upd_params = init_mlp_params(k_upd, D, H, O)
        avg_slab, n_averaged = update_parameters(avg_slab, upd_params, n_averaged)
        ref_n += 1
        ref_avg = tuple((ps * ref_n + pm) / (ref_n + 1)
                        for ps, pm in zip(ref_avg, upd_params))

    avg_params = unpack_params(avg_slab, meta)
    assert n_averaged == ref_n == 2
    for a, r in zip(avg_params, ref_avg):
        assert jnp.allclose(a, r, atol=1e-6, rtol=1e-6), "SWA update mismatch"

    # Pad/cast the averaged weights once; reused for every forward call.
    fwd_weights = prepare_forward_weights(avg_params)

    # AveragedModel.forward(x) == averaged_model(x)
    x = jax.random.normal(k_x, (B, D), jnp.float32)
    y = jax.block_until_ready(averaged_mlp_forward(x, fwd_weights))
    assert y.shape == (B, O)

    # References: bf16-matmul reference (same precision path) and full f32.
    w1, b1, w2, b2 = avg_params
    xb, w1b, w2b = (t.astype(jnp.bfloat16) for t in (x, w1, w2))
    h_ref = jnp.maximum(
        jnp.dot(xb, w1b, preferred_element_type=jnp.float32) + b1, 0.0)
    y_ref_bf16 = jnp.dot(h_ref.astype(jnp.bfloat16), w2b,
                         preferred_element_type=jnp.float32) + b2
    y_ref_f32 = jnp.maximum(x @ w1 + b1, 0.0) @ w2 + b2

    assert jnp.allclose(y, y_ref_bf16, atol=1e-3, rtol=1e-3), "fwd mismatch (bf16 ref)"
    assert jnp.allclose(y, y_ref_f32, atol=2e-2, rtol=2e-2), "fwd mismatch (f32 ref)"

    print("KERNEL_OK")
</pallas_src>

<mosaic_0001>
module attributes {stable_mosaic.version = 11 : i64} {
  func.func @_swa_update_kernel(%arg0: i32, %arg1: memref<48x128xf32, #tpu.memory_space<vmem>>, %arg2: memref<48x128xf32, #tpu.memory_space<vmem>>, %arg3: memref<1xf32, #tpu.memory_space<smem>>, %arg4: memref<48x128xf32, #tpu.memory_space<vmem>>) attributes {dimension_semantics = [#tpu.dimension_semantics<parallel>], iteration_bounds = array<i64: 1>, scalar_prefetch = 0 : i64, scratch_operands = 0 : i64, tpu.core_type = #tpu.core_type<tc>, window_params = [{transform_indices = @transform_0, window_bounds = array<i64: 48, 128>}, {transform_indices = @transform_1, window_bounds = array<i64: 48, 128>}, {transform_indices = @transform_2, window_bounds = array<i64: 1>}, {transform_indices = @transform_3, window_bounds = array<i64: 48, 128>}]} {
    %c0 = arith.constant 0 : index
    %c0_0 = arith.constant 0 : index
    %0 = vector.load %arg1[%c0, %c0_0] : memref<48x128xf32, #tpu.memory_space<vmem>>, vector<48x128xf32>
    %c0_1 = arith.constant 0 : index
    %c0_2 = arith.constant 0 : index
    %1 = vector.load %arg2[%c0_1, %c0_2] : memref<48x128xf32, #tpu.memory_space<vmem>>, vector<48x128xf32>
    %2 = arith.subf %1, %0 : vector<48x128xf32>
    %c0_3 = arith.constant 0 : index
    %3 = memref.load %arg3[%c0_3] : memref<1xf32, #tpu.memory_space<smem>>
    %4 = vector.broadcast %3 : f32 to vector<48x128xf32>
    %5 = arith.mulf %2, %4 : vector<48x128xf32>
    %6 = arith.addf %0, %5 : vector<48x128xf32>
    %c0_4 = arith.constant 0 : index
    %c0_5 = arith.constant 0 : index
    %7 = vector.load %arg4[%c0_4, %c0_5] : memref<48x128xf32, #tpu.memory_space<vmem>>, vector<48x128xf32>
    tpu.vector_store %arg4[%c0_4, %c0_5], %6 {strides = array<i32>} : memref<48x128xf32, #tpu.memory_space<vmem>>, vector<48x128xf32>,
    return
  }
  func.func @transform_0(%arg0: i32) -> (i32, i32) {
    %c0_i32 = arith.constant 0 : i32
    %c0_i32_0 = arith.constant 0 : i32
    return %arg0, %c0_i32 : i32, i32
  }
  func.func @transform_1(%arg0: i32) -> (i32, i32) {
    %c0_i32 = arith.constant 0 : i32
    %c0_i32_0 = arith.constant 0 : i32
    return %arg0, %c0_i32 : i32, i32
  }
  func.func @transform_2(%arg0: i32) -> i32 {
    %c0_i32 = arith.constant 0 : i32
    %c0_i32_0 = arith.constant 0 : i32
    return %c0_i32 : i32
  }
  func.func @transform_3(%arg0: i32) -> (i32, i32) {
    %c0_i32 = arith.constant 0 : i32
    %c0_i32_0 = arith.constant 0 : i32
    return %arg0, %c0_i32 : i32, i32
  }
}

</mosaic_0001>

<llo_original>
// kernel: _swa_pallas.1
$region0: #{_swa_pallas.1}
  #allocation0 [shape = 'u32[]', space=smem, size = 0x4, offset = 0x4, fixed_abs, tag = 'smem constant byte address 0x4 - core index']
  #allocation1 [shape = 'u32[144,128]{1,0:T(1,128)}', space=vmem, size = 0x12000, scoped, tag = 'internal scratch']
  #allocation2 [shape = 'f32[1]{0:T(128)S(6)}', space=smem, size = 0x200, scoped, tag = 'scoped memory for _swa_pallas.1']
  %s0 = inlined_call_operand.hbm [shape: f32[48,128], index: 0, kind: input, shape index: {}, may-alias: {0,3}]
  %s1 = inlined_call_operand.hbm [shape: f32[48,128], index: 1, kind: input, shape index: {}]
  %s2 = inlined_call_operand.<no memory space> [shape: f32[1], index: 2, kind: input, shape index: {}]
  %s3 = inlined_call_operand.hbm [shape: f32[48,128], index: 3, kind: output, shape index: {}, may-alias: {0,3}]
  %s4 = sld [smem:[#allocation0]]
  $region30: #{_swa_pallas.1} parent=0
    _
  %s6 = ssub.s32 1, %s4
  %s7 = scalar_select 0, %s6, %s4
  %8 = sst [smem:[#allocation2]] %s2
  $region1: #{_swa_pallas.1} parent=0
    #allocation3 [shape = 'u8[24576]{0}', space=vmem, size = 0x6000, scoped, tag = 'input window, operand 0, single buffered']
    #allocation4 [shape = 's32[1]{0}', space=sflag, size = 0x4, scoped, tag = 'scoped memory for _swa_pallas.1']
    #allocation5 [shape = 's32[1]{0}', space=sflag, size = 0x4, scoped, tag = 'scoped memory for _swa_pallas.1']
    #allocation6 [shape = 'u8[24576]{0}', space=vmem, size = 0x6000, scoped, tag = 'input window, operand 1, single buffered']
    #allocation7 [shape = 's32[1]{0}', space=sflag, size = 0x4, scoped, tag = 'scoped memory for _swa_pallas.1']
    #allocation8 [shape = 'u8[24576]{0}', space=vmem, size = 0x6000, scoped, tag = 'output window, operand 0, single buffered']
    %9 = vsyncpa [#allocation4], 0
    %10 = vsyncpa [#allocation7], 0
    %11 = vsyncpa [#allocation5], 0
    // Predicated region
    $region2: #{_swa_pallas.1} parent=1 // pred_check
      _
    $region3: #{_swa_pallas.1} parent=1 // pred_check_branch
      %13 = sbr.rel (0) target = $region5
    $region4: #{_swa_pallas.1} parent=1 // pred_region
      %s15 = ssub.s32 768, 768
      %16 = vsyncadd [#allocation4], %s15
      %s17 = sshll.u32 [#allocation3], 4
      %s18 = int_to_ptr.vmem [resolvable:$true] %s17
      %23 = dma.hbm_to_vmem [thread:$0]  %s0, 768, %s18, [#allocation4], 128, 128, 8
    $region5: #{_swa_pallas.1} parent=1 // pred_fallthru
      _
    // Predicated region
    $region6: #{_swa_pallas.1} parent=1 // pred_check
      _
    $region7: #{_swa_pallas.1} parent=1 // pred_check_branch
      %25 = sbr.rel (0) target = $region9
    $region8: #{_swa_pallas.1} parent=1 // pred_region
      %s27 = ssub.s32 768, 768
      %28 = vsyncadd [#allocation7], %s27
      %s29 = sshll.u32 [#allocation6], 4
      %s30 = int_to_ptr.vmem [resolvable:$true] %s29
      %35 = dma.hbm_to_vmem [thread:$0]  %s1, 768, %s30, [#allocation7], 128, 128, 8
    $region9: #{_swa_pallas.1} parent=1 // pred_fallthru
      _
    // Predicated region
    $region10: #{_swa_pallas.1} parent=1 // pred_check
      _
    $region11: #{_swa_pallas.1} parent=1 // pred_check_branch
      %37 = sbr.rel (0) target = $region13
    $region12: #{_swa_pallas.1} parent=1 // pred_region
      _
    $region13: #{_swa_pallas.1} parent=1 // pred_fallthru
      _
    // Predicated region
    $region14: #{_swa_pallas.1} parent=1 // pred_check
      _
    $region15: #{_swa_pallas.1} parent=1 // pred_check_branch
      %39 = sbr.rel (0) target = $region17
    $region16: #{_swa_pallas.1} parent=1 // pred_region
      %40 = dma.done [#allocation4], 768
    $region17: #{_swa_pallas.1} parent=1 // pred_fallthru
      _
    // Predicated region
    $region18: #{_swa_pallas.1} parent=1 // pred_check
      _
    $region19: #{_swa_pallas.1} parent=1 // pred_check_branch
      %42 = sbr.rel (0) target = $region21
    $region20: #{_swa_pallas.1} parent=1 // pred_region
      %43 = dma.done [#allocation7], 768
    $region21: #{_swa_pallas.1} parent=1 // pred_fallthru
      _
    %v44 = vld [vmem:[#allocation3] sm:$0xff]
    %v45 = vld [vmem:[#allocation3 + $0x8] sm:$0xff]
    %v46 = vld [vmem:[#allocation3 + $0x10] sm:$0xff]
    %v47 = vld [vmem:[#allocation3 + $0x18] sm:$0xff]
    %v48 = vld [vmem:[#allocation3 + $0x20] sm:$0xff]
    %v49 = vld [vmem:[#allocation3 + $0x28] sm:$0xff]
    %v50 = vld [vmem:[#allocation6] sm:$0xff]
    %v51 = vld [vmem:[#allocation6 + $0x8] sm:$0xff]
    %v52 = vld [vmem:[#allocation6 + $0x10] sm:$0xff]
    %v53 = vld [vmem:[#allocation6 + $0x18] sm:$0xff]
    %v54 = vld [vmem:[#allocation6 + $0x20] sm:$0xff]
    %v55 = vld [vmem:[#allocation6 + $0x28] sm:$0xff]
    %v56 = vsub.f32 %v50, %v44
    %v57 = vsub.f32 %v51, %v45
    %v58 = vsub.f32 %v52, %v46
    %v59 = vsub.f32 %v53, %v47
    %v60 = vsub.f32 %v54, %v48
    %v61 = vsub.f32 %v55, %v49
    %s62 = sld [smem:[#allocation2]]
    %v63 = vstv %s62
    %v64 = vmul.f32 %v56, %v63
    %v65 = vmul.f32 %v57, %v63
    %v66 = vmul.f32 %v58, %v63
    %v67 = vmul.f32 %v59, %v63
    %v68 = vmul.f32 %v60, %v63
    %v69 = vmul.f32 %v61, %v63
    %v70 = vadd.f32 %v44, %v64
    %v71 = vadd.f32 %v45, %v65
    %v72 = vadd.f32 %v46, %v66
    %v73 = vadd.f32 %v47, %v67
    %v74 = vadd.f32 %v48, %v68
    %v75 = vadd.f32 %v49, %v69
    %76 = vst [vmem:[#allocation8] sm:$0xff] %v70
    %77 = vst [vmem:[#allocation8 + $0x8] sm:$0xff] %v71
    %78 = vst [vmem:[#allocation8 + $0x10] sm:$0xff] %v72
    %79 = vst [vmem:[#allocation8 + $0x18] sm:$0xff] %v73
    %80 = vst [vmem:[#allocation8 + $0x20] sm:$0xff] %v74
    %81 = vst [vmem:[#allocation8 + $0x28] sm:$0xff] %v75
    // Predicated region
    $region22: #{_swa_pallas.1} parent=1 // pred_check
      _
    $region23: #{_swa_pallas.1} parent=1 // pred_check_branch
      %83 = sbr.rel (0) target = $region25
    $region24: #{_swa_pallas.1} parent=1 // pred_region
      %s85 = ssub.s32 768, 768
      %86 = vsyncadd [#allocation5], %s85
      %s87 = sshll.u32 [#allocation8], 4
      %s88 = int_to_ptr.vmem [resolvable:$true] %s87
      %93 = dma.vmem_to_hbm [thread:$0]  %s88, 768, %s3, [#allocation5], 128, 128, 8
    $region25: #{_swa_pallas.1} parent=1 // pred_fallthru
      _
    // Predicated region
    $region26: #{_swa_pallas.1} parent=1 // pred_check
      _
    $region27: #{_swa_pallas.1} parent=1 // pred_check_branch
      %95 = sbr.rel (0) target = $region29
    $region28: #{_swa_pallas.1} parent=1 // pred_region
      %96 = dma.done [#allocation5], 768
    $region29: #{_swa_pallas.1} parent=1 // pred_fallthru
      _
    %97 = vsyncpa [#allocation4], 1
    %98 = vsyncpa [#allocation7], 1
    %99 = vsyncpa [#allocation5], 1

</llo_original>
